<compile_context>
chip_gen: v5e
topology: v5e:2x2
jax: 0.10.0
libtpu: 0.0.40
codegen_flags: <defaults>
</compile_context>

<pallas_src>
import jax
import jax.numpy as jnp
from jax.experimental import pallas as pl
from jax.experimental.pallas import tpu as pltpu


# ----------------------------------------------------------------------------
# Pallas kernel: fused  out = relu(x @ W1 + b1) @ W2 + b2   (one batch tile)
# ----------------------------------------------------------------------------
def _mlp_kernel(x_ref, w1_ref, b1_ref, w2_ref, b2_ref, o_ref):
    # Native-dtype operands (bf16 in the demo) -> MXU bf16 path, f32 accumulate.
    h = jnp.dot(x_ref[...], w1_ref[...], preferred_element_type=jnp.float32)
    h = h + b1_ref[...].astype(jnp.float32)   # (1, H) broadcasts over rows
    h = jnp.maximum(h, 0.0)                   # ReLU on the VPU, in f32
    out = jnp.dot(h.astype(w2_ref.dtype), w2_ref[...],
                  preferred_element_type=jnp.float32)
    out = out + b2_ref[...].astype(jnp.float32)
    o_ref[...] = out.astype(o_ref.dtype)


# ----------------------------------------------------------------------------
# Tile selection (HBM-streaming bound kernel: bigger batch tiles, no padding)
# ----------------------------------------------------------------------------
def _default_target_tm():
    """Default batch-tile target; v5e (128 MiB VMEM, 1 TC) benefits from 1024."""
    try:
        kind = jax.devices()[0].device_kind.lower()
    except Exception:
        return 512
    if "v5e" in kind or "v5 lite" in kind or "v5lite" in kind:
        return 1024
    return 512


def _pick_batch_tile(batch, target_tm):
    """Return (tm, padded_batch).

    Preference order:
      * tile divides `batch` exactly (no wrapper pad / output slice),
      * tile is a multiple of 16 (bf16 sublane packing), fallback multiple of 8,
      * large batches keep >= 4 grid steps (>= 2 per TensorCore on v7x),
      * small ragged batches run as one full-array block (legal: block == full
        array dims sidesteps the (8,128) divisibility rule, and no padding).
    """
    target = max(8, min(target_tm, max(128, batch // 4), batch))
    for step in (16, 8):
        t = (target // step) * step
        while t >= step:
            if batch % t == 0:
                return t, batch
            t -= step
    if batch <= 4096:
        # Ragged but small: single full-array block, zero padding.
        return batch, batch
    # Large ragged batch: pad to a tile multiple (rare path).
    # TODO(synk): handle the ragged tail with an in-kernel masked store instead
    #             of a wrapper pad + slice.
    tm = max(16, (target // 16) * 16)
    return tm, pl.cdiv(batch, tm) * tm


def _apply_model_pallas(params, data, *, target_tm=None):
    """Run the MLP forward with a batch-tiled, pipelined Pallas grid."""
    w1, b1, w2, b2 = params["w1"], params["b1"], params["w2"], params["b2"]
    batch, d_in = data.shape
    d_hidden = w1.shape[1]
    d_out = w2.shape[1]
    assert w1.shape == (d_in, d_hidden)
    assert b1.shape == (1, d_hidden)
    assert w2.shape == (d_hidden, d_out)
    assert b2.shape == (1, d_out)

    if target_tm is None:
        target_tm = _default_target_tm()
    tm, padded_batch = _pick_batch_tile(batch, target_tm)

    x = data
    if padded_batch != batch:
        # Only reached for large batches with no usable divisor tile; the common
        # path above always picks a tile that divides `batch` exactly.
        x = jnp.pad(data, ((0, padded_batch - batch), (0, 0)))

    grid = (padded_batch // tm,)

    def _call(single_buffer_weights):
        # Weights / biases never change block index: constant index_map keeps
        # them VMEM-resident across the whole grid; Buffered(1) drops the
        # pointless second pipeline buffer for them.
        resident = (
            dict(pipeline_mode=pl.Buffered(1)) if single_buffer_weights else {}
        )
        return pl.pallas_call(
            _mlp_kernel,
            out_shape=jax.ShapeDtypeStruct((padded_batch, d_out), data.dtype),
            grid=grid,
            in_specs=[
                # Activations: tiled over batch, double-buffered by the pipeline.
                pl.BlockSpec((tm, d_in), lambda i: (i, 0)),
                # Weights / biases: VMEM-resident across the grid.
                pl.BlockSpec((d_in, d_hidden), lambda i: (0, 0), **resident),
                pl.BlockSpec((1, d_hidden), lambda i: (0, 0), **resident),
                pl.BlockSpec((d_hidden, d_out), lambda i: (0, 0), **resident),
                pl.BlockSpec((1, d_out), lambda i: (0, 0), **resident),
            ],
            out_specs=pl.BlockSpec((tm, d_out), lambda i: (i, 0)),
            compiler_params=pltpu.CompilerParams(
                # Megacore sharding on v7x; no-op on single-TC v5e/v6e.
                dimension_semantics=("parallel",),
                # No vmem_limit_bytes: working set is a few MiB (double-buffered
                # (tm, 128) bf16 in/out tiles + ~96 KiB of weights), well under
                # the default scoped limit on v5e/v6e/v7x.
            ),
        )(x, w1, b1, w2, b2)

    try:
        out = _call(True)
    except Exception:
        # Fallback for JAX builds that reject pipeline_mode=pl.Buffered(1).
        out = _call(False)

    if padded_batch != batch:
        out = out[:batch]
    return out


# ----------------------------------------------------------------------------
# Learner: faithful dispatch semantics of metann.meta.Learner
# ----------------------------------------------------------------------------
class Learner:
    """JAX/Pallas port of metann's Learner dispatcher."""

    def __init__(self, stored_params):
        # `stored_params` play the role of the wrapped nn.Module's own state,
        # used by forward_inplace.
        self.stored_params = stored_params

    def __call__(self, *args, inplace=False, **kwargs):
        return self.forward(*args, inplace=inplace, **kwargs)

    def forward(self, *args, inplace=False, **kwargs):
        if inplace:
            return self.forward_inplace(*args, **kwargs)
        else:
            return self.forward_pure(*args, **kwargs)

    def forward_pure(self, model, data):
        # Pure / functional apply: use exactly the params handed in.
        return _apply_model_pallas(model, data)

    def forward_inplace(self, model, data):
        # "In-place" apply: use the Learner's own stored parameters
        # (the passed `model` only defines the expected structure).
        jax.tree_util.tree_structure(model)  # structural validation, mirrors API
        return _apply_model_pallas(self.stored_params, data)


# ----------------------------------------------------------------------------
# Deterministic parameter / input construction + reference check
# ----------------------------------------------------------------------------
def _make_params(key, d_in, d_hidden, d_out, dtype=jnp.bfloat16):
    k1, k2, k3, k4 = jax.random.split(key, 4)
    return {
        "w1": (jax.random.normal(k1, (d_in, d_hidden), jnp.float32) * 0.1).astype(dtype),
        "b1": (jax.random.normal(k2, (1, d_hidden), jnp.float32) * 0.1).astype(dtype),
        "w2": (jax.random.normal(k3, (d_hidden, d_out), jnp.float32) * 0.1).astype(dtype),
        "b2": (jax.random.normal(k4, (1, d_out), jnp.float32) * 0.1).astype(dtype),
    }


def _reference_apply(params, data):
    # Mirrors the kernel numerics: bf16 matmul operands, f32 accumulation.
    h = jnp.dot(data, params["w1"], preferred_element_type=jnp.float32)
    h = h + params["b1"].astype(jnp.float32)
    h = jnp.maximum(h, 0.0)
    out = jnp.dot(h.astype(params["w2"].dtype), params["w2"],
                  preferred_element_type=jnp.float32)
    out = out + params["b2"].astype(jnp.float32)
    return out.astype(data.dtype)


if __name__ == "__main__":
    key = jax.random.PRNGKey(0)
    k_params, k_params2, k_data = jax.random.split(key, 3)

    # Lane-dense shapes: feature dims are multiples of 128; batch divides the
    # chosen tile exactly so no wrapper pad/slice passes are emitted.
    # (Note: 128-wide contractions half-fill the 256x256 MXU on v6e/v7x, but the
    #  kernel is HBM-bound so this is non-binding at these sizes.)
    batch, d_in, d_hidden, d_out = 256, 128, 128, 128
    params = _make_params(k_params, d_in, d_hidden, d_out)          # passed to forward_pure
    stored_params = _make_params(k_params2, d_in, d_hidden, d_out)  # Learner's own state
    data = jax.random.normal(k_data, (batch, d_in), jnp.float32).astype(jnp.bfloat16)

    learner = Learner(stored_params)

    # Pure (functional) path
    out_pure = learner(params, data, inplace=False)
    out_pure = jax.block_until_ready(out_pure)

    # In-place path (uses the learner's stored params)
    out_inplace = learner(params, data, inplace=True)
    out_inplace = jax.block_until_ready(out_inplace)

    # Correctness checks against a plain-JAX reference (same numerics)
    ref_pure = _reference_apply(params, data)
    ref_inplace = _reference_apply(stored_params, data)
    assert out_pure.shape == (batch, d_out)
    assert out_inplace.shape == (batch, d_out)
    assert jnp.allclose(out_pure.astype(jnp.float32),
                        ref_pure.astype(jnp.float32), atol=1e-2, rtol=1e-2)
    assert jnp.allclose(out_inplace.astype(jnp.float32),
                        ref_inplace.astype(jnp.float32), atol=1e-2, rtol=1e-2)

    print("KERNEL_OK")
</pallas_src>

<mosaic_0001>
module attributes {stable_mosaic.version = 11 : i64} {
  func.func @_mlp_kernel(%arg0: i32, %arg1: memref<128x128xbf16, #tpu.memory_space<vmem>>, %arg2: memref<128x128xbf16, #tpu.memory_space<vmem>>, %arg3: memref<1x128xbf16, #tpu.memory_space<vmem>>, %arg4: memref<128x128xbf16, #tpu.memory_space<vmem>>, %arg5: memref<1x128xbf16, #tpu.memory_space<vmem>>, %arg6: memref<128x128xbf16, #tpu.memory_space<vmem>>) attributes {dimension_semantics = [#tpu.dimension_semantics<parallel>], iteration_bounds = array<i64: 2>, scalar_prefetch = 0 : i64, scratch_operands = 0 : i64, tpu.core_type = #tpu.core_type<tc>, window_params = [{transform_indices = @transform_0, window_bounds = array<i64: 128, 128>}, {pipeline_mode = #tpu.pipeline_mode<synchronous>, transform_indices = @transform_1, window_bounds = array<i64: 128, 128>}, {pipeline_mode = #tpu.pipeline_mode<synchronous>, transform_indices = @transform_2, window_bounds = array<i64: 1, 128>}, {pipeline_mode = #tpu.pipeline_mode<synchronous>, transform_indices = @transform_3, window_bounds = array<i64: 128, 128>}, {pipeline_mode = #tpu.pipeline_mode<synchronous>, transform_indices = @transform_4, window_bounds = array<i64: 1, 128>}, {transform_indices = @transform_5, window_bounds = array<i64: 128, 128>}]} {
    %c0 = arith.constant 0 : index
    %c0_0 = arith.constant 0 : index
    %0 = vector.load %arg1[%c0, %c0_0] : memref<128x128xbf16, #tpu.memory_space<vmem>>, vector<128x128xbf16>
    %c0_1 = arith.constant 0 : index
    %c0_2 = arith.constant 0 : index
    %1 = vector.load %arg2[%c0_1, %c0_2] : memref<128x128xbf16, #tpu.memory_space<vmem>>, vector<128x128xbf16>
    %cst = arith.constant dense<0.000000e+00> : vector<128x128xf32>
    %2 = tpu.matmul %0, %1, %cst {dimension_numbers = #tpu.dot_dimension_numbers<[1], [0], [0], [1], [0, 0, 1, 1], [], []>} : vector<128x128xbf16>, vector<128x128xbf16>, vector<128x128xf32> -> vector<128x128xf32>
    %c0_3 = arith.constant 0 : index
    %c0_4 = arith.constant 0 : index
    %3 = vector.load %arg3[%c0_3, %c0_4] : memref<1x128xbf16, #tpu.memory_space<vmem>>, vector<1x128xbf16>
    %4 = arith.extf %3 : vector<1x128xbf16> to vector<1x128xf32>
    %5 = vector.broadcast %4 : vector<1x128xf32> to vector<128x128xf32>
    %6 = arith.addf %2, %5 : vector<128x128xf32>
    %cst_5 = arith.constant 0.000000e+00 : f32
    %7 = vector.broadcast %cst_5 : f32 to vector<128x128xf32>
    %8 = arith.maximumf %6, %7 : vector<128x128xf32>
    %9 = arith.truncf %8 : vector<128x128xf32> to vector<128x128xbf16>
    %c0_6 = arith.constant 0 : index
    %c0_7 = arith.constant 0 : index
    %10 = vector.load %arg4[%c0_6, %c0_7] : memref<128x128xbf16, #tpu.memory_space<vmem>>, vector<128x128xbf16>
    %cst_8 = arith.constant dense<0.000000e+00> : vector<128x128xf32>
    %11 = tpu.matmul %9, %10, %cst_8 {dimension_numbers = #tpu.dot_dimension_numbers<[1], [0], [0], [1], [0, 0, 1, 1], [], []>} : vector<128x128xbf16>, vector<128x128xbf16>, vector<128x128xf32> -> vector<128x128xf32>
    %c0_9 = arith.constant 0 : index
    %c0_10 = arith.constant 0 : index
    %12 = vector.load %arg5[%c0_9, %c0_10] : memref<1x128xbf16, #tpu.memory_space<vmem>>, vector<1x128xbf16>
    %13 = arith.extf %12 : vector<1x128xbf16> to vector<1x128xf32>
    %14 = vector.broadcast %13 : vector<1x128xf32> to vector<128x128xf32>
    %15 = arith.addf %11, %14 : vector<128x128xf32>
    %16 = arith.truncf %15 : vector<128x128xf32> to vector<128x128xbf16>
    %c0_11 = arith.constant 0 : index
    %c0_12 = arith.constant 0 : index
    %17 = vector.load %arg6[%c0_11, %c0_12] : memref<128x128xbf16, #tpu.memory_space<vmem>>, vector<128x128xbf16>
    tpu.vector_store %arg6[%c0_11, %c0_12], %16 {strides = array<i32>} : memref<128x128xbf16, #tpu.memory_space<vmem>>, vector<128x128xbf16>,
    return
  }
  func.func @transform_0(%arg0: i32) -> (i32, i32) {
    %c0_i32 = arith.constant 0 : i32
    %c0_i32_0 = arith.constant 0 : i32
    return %arg0, %c0_i32 : i32, i32
  }
  func.func @transform_1(%arg0: i32) -> (i32, i32) {
    %c0_i32 = arith.constant 0 : i32
    %c0_i32_0 = arith.constant 0 : i32
    %c0_i32_1 = arith.constant 0 : i32
    return %c0_i32, %c0_i32_0 : i32, i32
  }
  func.func @transform_2(%arg0: i32) -> (i32, i32) {
    %c0_i32 = arith.constant 0 : i32
    %c0_i32_0 = arith.constant 0 : i32
    %c0_i32_1 = arith.constant 0 : i32
    return %c0_i32, %c0_i32_0 : i32, i32
  }
  func.func @transform_3(%arg0: i32) -> (i32, i32) {
    %c0_i32 = arith.constant 0 : i32
    %c0_i32_0 = arith.constant 0 : i32
    %c0_i32_1 = arith.constant 0 : i32
    return %c0_i32, %c0_i32_0 : i32, i32
  }
  func.func @transform_4(%arg0: i32) -> (i32, i32) {
    %c0_i32 = arith.constant 0 : i32
    %c0_i32_0 = arith.constant 0 : i32
    %c0_i32_1 = arith.constant 0 : i32
    return %c0_i32, %c0_i32_0 : i32, i32
  }
  func.func @transform_5(%arg0: i32) -> (i32, i32) {
    %c0_i32 = arith.constant 0 : i32
    %c0_i32_0 = arith.constant 0 : i32
    return %arg0, %c0_i32 : i32, i32
  }
}

module attributes {stable_mosaic.version = 11 : i64} {
  func.func @_mlp_kernel(%arg0: i32, %arg1: memref<128x128xbf16, #tpu.memory_space<vmem>>, %arg2: memref<128x128xbf16, #tpu.memory_space<vmem>>, %arg3: memref<1x128xbf16, #tpu.memory_space<vmem>>, %arg4: memref<128x128xbf16, #tpu.memory_space<vmem>>, %arg5: memref<1x128xbf16, #tpu.memory_space<vmem>>, %arg6: memref<128x128xbf16, #tpu.memory_space<vmem>>) attributes {dimension_semantics = [#tpu.dimension_semantics<parallel>], iteration_bounds = array<i64: 2>, scalar_prefetch = 0 : i64, scratch_operands = 0 : i64, tpu.core_type = #tpu.core_type<tc>, window_params = [{transform_indices = @transform_0, window_bounds = array<i64: 128, 128>}, {pipeline_mode = #tpu.pipeline_mode<synchronous>, transform_indices = @transform_1, window_bounds = array<i64: 128, 128>}, {pipeline_mode = #tpu.pipeline_mode<synchronous>, transform_indices = @transform_2, window_bounds = array<i64: 1, 128>}, {pipeline_mode = #tpu.pipeline_mode<synchronous>, transform_indices = @transform_3, window_bounds = array<i64: 128, 128>}, {pipeline_mode = #tpu.pipeline_mode<synchronous>, transform_indices = @transform_4, window_bounds = array<i64: 1, 128>}, {transform_indices = @transform_5, window_bounds = array<i64: 128, 128>}]} {
    %c0 = arith.constant 0 : index
    %c0_0 = arith.constant 0 : index
    %0 = vector.load %arg1[%c0, %c0_0] : memref<128x128xbf16, #tpu.memory_space<vmem>>, vector<128x128xbf16>
    %c0_1 = arith.constant 0 : index
    %c0_2 = arith.constant 0 : index
    %1 = vector.load %arg2[%c0_1, %c0_2] : memref<128x128xbf16, #tpu.memory_space<vmem>>, vector<128x128xbf16>
    %cst = arith.constant dense<0.000000e+00> : vector<128x128xf32>
    %2 = tpu.matmul %0, %1, %cst {dimension_numbers = #tpu.dot_dimension_numbers<[1], [0], [0], [1], [0, 0, 1, 1], [], []>} : vector<128x128xbf16>, vector<128x128xbf16>, vector<128x128xf32> -> vector<128x128xf32>
    %c0_3 = arith.constant 0 : index
    %c0_4 = arith.constant 0 : index
    %3 = vector.load %arg3[%c0_3, %c0_4] : memref<1x128xbf16, #tpu.memory_space<vmem>>, vector<1x128xbf16>
    %4 = arith.extf %3 : vector<1x128xbf16> to vector<1x128xf32>
    %5 = vector.broadcast %4 : vector<1x128xf32> to vector<128x128xf32>
    %6 = arith.addf %2, %5 : vector<128x128xf32>
    %cst_5 = arith.constant 0.000000e+00 : f32
    %7 = vector.broadcast %cst_5 : f32 to vector<128x128xf32>
    %8 = arith.maximumf %6, %7 : vector<128x128xf32>
    %9 = arith.truncf %8 : vector<128x128xf32> to vector<128x128xbf16>
    %c0_6 = arith.constant 0 : index
    %c0_7 = arith.constant 0 : index
    %10 = vector.load %arg4[%c0_6, %c0_7] : memref<128x128xbf16, #tpu.memory_space<vmem>>, vector<128x128xbf16>
    %cst_8 = arith.constant dense<0.000000e+00> : vector<128x128xf32>
    %11 = tpu.matmul %9, %10, %cst_8 {dimension_numbers = #tpu.dot_dimension_numbers<[1], [0], [0], [1], [0, 0, 1, 1], [], []>} : vector<128x128xbf16>, vector<128x128xbf16>, vector<128x128xf32> -> vector<128x128xf32>
    %c0_9 = arith.constant 0 : index
    %c0_10 = arith.constant 0 : index
    %12 = vector.load %arg5[%c0_9, %c0_10] : memref<1x128xbf16, #tpu.memory_space<vmem>>, vector<1x128xbf16>
    %13 = arith.extf %12 : vector<1x128xbf16> to vector<1x128xf32>
    %14 = vector.broadcast %13 : vector<1x128xf32> to vector<128x128xf32>
    %15 = arith.addf %11, %14 : vector<128x128xf32>
    %16 = arith.truncf %15 : vector<128x128xf32> to vector<128x128xbf16>
    %c0_11 = arith.constant 0 : index
    %c0_12 = arith.constant 0 : index
    %17 = vector.load %arg6[%c0_11, %c0_12] : memref<128x128xbf16, #tpu.memory_space<vmem>>, vector<128x128xbf16>
    tpu.vector_store %arg6[%c0_11, %c0_12], %16 {strides = array<i32>} : memref<128x128xbf16, #tpu.memory_space<vmem>>, vector<128x128xbf16>,
    return
  }
  func.func @transform_0(%arg0: i32) -> (i32, i32) {
    %c0_i32 = arith.constant 0 : i32
    %c0_i32_0 = arith.constant 0 : i32
    return %arg0, %c0_i32 : i32, i32
  }
  func.func @transform_1(%arg0: i32) -> (i32, i32) {
    %c0_i32 = arith.constant 0 : i32
    %c0_i32_0 = arith.constant 0 : i32
    %c0_i32_1 = arith.constant 0 : i32
    return %c0_i32, %c0_i32_0 : i32, i32
  }
  func.func @transform_2(%arg0: i32) -> (i32, i32) {
    %c0_i32 = arith.constant 0 : i32
    %c0_i32_0 = arith.constant 0 : i32
    %c0_i32_1 = arith.constant 0 : i32
    return %c0_i32, %c0_i32_0 : i32, i32
  }
  func.func @transform_3(%arg0: i32) -> (i32, i32) {
    %c0_i32 = arith.constant 0 : i32
    %c0_i32_0 = arith.constant 0 : i32
    %c0_i32_1 = arith.constant 0 : i32
    return %c0_i32, %c0_i32_0 : i32, i32
  }
  func.func @transform_4(%arg0: i32) -> (i32, i32) {
    %c0_i32 = arith.constant 0 : i32
    %c0_i32_0 = arith.constant 0 : i32
    %c0_i32_1 = arith.constant 0 : i32
    return %c0_i32, %c0_i32_0 : i32, i32
  }
  func.func @transform_5(%arg0: i32) -> (i32, i32) {
    %c0_i32 = arith.constant 0 : i32
    %c0_i32_0 = arith.constant 0 : i32
    return %arg0, %c0_i32 : i32, i32
  }
}

</mosaic_0001>

<llo_original>
// kernel: tpu_custom_call.1
$region0: #{tpu_custom_call.1}
  #allocation0 [shape = 'u32[]', space=smem, size = 0x4, offset = 0x4, fixed_abs, tag = 'smem constant byte address 0x4 - core index']
  #allocation1 [shape = 'u32[72,128]{1,0:T(1,128)}', space=vmem, size = 0x9000, scoped, tag = 'internal scratch']
  %s0 = inlined_call_operand.hbm [shape: bf16[256,128], index: 0, kind: input, shape index: {}]
  %s1 = inlined_call_operand.hbm [shape: bf16[128,128], index: 1, kind: input, shape index: {}]
  %s2 = inlined_call_operand.vmem [shape: bf16[1,128], index: 2, kind: input, shape index: {}]
  %s3 = inlined_call_operand.hbm [shape: bf16[128,128], index: 3, kind: input, shape index: {}]
  %s4 = inlined_call_operand.vmem [shape: bf16[1,128], index: 4, kind: input, shape index: {}]
  %s5 = inlined_call_operand.hbm [shape: bf16[256,128], index: 5, kind: output, shape index: {}]
  %s6 = sld [smem:[#allocation0]]
  $region65: #{tpu_custom_call.1} parent=0
    _
  %s8 = ssub.s32 1, %s6
  %s9 = scalar_select 0, %s8, %s6
  $region1: #{tpu_custom_call.1} parent=0
    #allocation2 [shape = 'u8[65536]{0}', space=vmem, size = 0x10000, scoped, tag = 'input window, operand 0']
    #allocation3 [shape = 's32[2]{0}', space=sflag, size = 0x8, scoped, tag = 'scoped memory for tpu_custom_call.1']
    #allocation4 [shape = 's32[2]{0}', space=sflag, size = 0x8, scoped, tag = 'scoped memory for tpu_custom_call.1']
    #allocation5 [shape = 'u8[32768]{0}', space=vmem, size = 0x8000, scoped, tag = 'input window, operand 1, single buffered']
    #allocation6 [shape = 's32[1]{0}', space=sflag, size = 0x4, scoped, tag = 'scoped memory for tpu_custom_call.1']
    #allocation7 [shape = 'u8[32768]{0}', space=vmem, size = 0x8000, scoped, tag = 'input window, operand 3, single buffered']
    #allocation8 [shape = 'u8[65536]{0}', space=vmem, size = 0x10000, scoped, tag = 'output window, operand 0']
    %10 = vsyncpa [#allocation3], 0
    %s11 = scalar_lea.sflag [#allocation3], 1
    %12 = vsyncpa %s11, 0
    %13 = vsyncpa [#allocation6], 0
    %14 = vsyncpa [#allocation4], 0
    %s15 = scalar_lea.sflag [#allocation4], 1
    %16 = vsyncpa %s15, 0
    loop: start=0, step=1, limit=4
    $region2: #{tpu_custom_call.1} parent=1 // loop_pre_header
      _
    $region3: #{tpu_custom_call.1} parent=1 // loop_header
      %s18 = sphi 0, %s22
      %p19 = scmp.ge.s32.totalorder %s18, 4
      %s28 = sphi 0, %s30
      %s31 = sphi 0, %s28
      %s32 = sphi 0, %s31
      %s48 = sphi 0, %s32
      %s52 = sphi 0, %s52
      %s54 = sphi 0, %s52
      %s55 = sphi 0, %s54
      %s69 = sphi 0, %s55
      %s73 = sphi 0, %s73
      %s75 = sphi 0, %s73
      %s76 = sphi 0, %s75
      %s90 = sphi 0, %s76
      %s94 = sphi 0, %s94
      %s96 = sphi 0, %s94
      %s97 = sphi 0, %s96
      %s111 = sphi 0, %s97
      %s115 = sphi 0, %s115
      %s117 = sphi 0, %s115
      %s118 = sphi 0, %s117
      %s132 = sphi 0, %s118
      %s138 = sphi 0, %s140
      %s141 = sphi 0, %s138
      %s142 = sphi 0, %s141
      %s158 = sphi 0, %s142
    $region4: #{tpu_custom_call.1} parent=1 // loop_header_branch
      %21 = sbr.rel (%p19) target = $region8
    $region5: #{tpu_custom_call.1} parent=1 // loop_body
      %s23 = ssub.s32 %s18, 1
      %s24 = ssub.s32 %s18, 2
      %s25 = sadd.s32 %s18, 1
      %s26 = ssub.s32 %s18, %s25
      %p27 = scmp.eq.s32.totalorder %s26, 0
      %s29 = sadd.s32 %s28, 1
      %s30 = scalar_select %p27, %s28, %s29
      %p33 = pneg %p27
      %p34 = scmp.eq.s32.totalorder %s18, 1
      %p35 = por %p33, %p34
      %p36 = scmp.ne.s32.totalorder %s28, %s31
      %p37 = scmp.eq.s32.totalorder %s18, 0
      %p38 = por %p36, %p37
      %p39 = scmp.ne.s32.totalorder %s28, %s31
      %p40 = scmp.eq.s32.totalorder %s23, 1
      %p41 = por %p39, %p40
      %p42 = scmp.ne.s32.totalorder %s31, %s32
      %p43 = scmp.eq.s32.totalorder %s23, 0
      %p44 = por %p42, %p43
      %p45 = scmp.ne.s32.totalorder %s31, %s32
      %p46 = scmp.eq.s32.totalorder %s24, 1
      %p47 = por %p45, %p46
      %p49 = scmp.ne.s32.totalorder %s32, %s48
      %p50 = scmp.eq.s32.totalorder %s24, 0
      %p51 = por %p49, %p50
      %s53 = sadd.s32 %s52, 1
      %p56 = scmp.eq.s32.totalorder %s18, 1
      %p57 = scmp.ne.s32.totalorder %s52, %s54
      %p58 = scmp.eq.s32.totalorder %s18, 0
      %p59 = por %p57, %p58
      %p60 = scmp.ne.s32.totalorder %s52, %s54
      %p61 = scmp.eq.s32.totalorder %s23, 1
      %p62 = por %p60, %p61
      %p63 = scmp.ne.s32.totalorder %s54, %s55
      %p64 = scmp.eq.s32.totalorder %s23, 0
      %p65 = por %p63, %p64
      %p66 = scmp.ne.s32.totalorder %s54, %s55
      %p67 = scmp.eq.s32.totalorder %s24, 1
      %p68 = por %p66, %p67
      %p70 = scmp.ne.s32.totalorder %s55, %s69
      %p71 = scmp.eq.s32.totalorder %s24, 0
      %p72 = por %p70, %p71
      %s74 = sadd.s32 %s73, 1
      %p77 = scmp.eq.s32.totalorder %s18, 1
      %p78 = scmp.ne.s32.totalorder %s73, %s75
      %p79 = scmp.eq.s32.totalorder %s18, 0
      %p80 = por %p78, %p79
      %p81 = scmp.ne.s32.totalorder %s73, %s75
      %p82 = scmp.eq.s32.totalorder %s23, 1
      %p83 = por %p81, %p82
      %p84 = scmp.ne.s32.totalorder %s75, %s76
      %p85 = scmp.eq.s32.totalorder %s23, 0
      %p86 = por %p84, %p85
      %p87 = scmp.ne.s32.totalorder %s75, %s76
      %p88 = scmp.eq.s32.totalorder %s24, 1
      %p89 = por %p87, %p88
      %p91 = scmp.ne.s32.totalorder %s76, %s90
      %p92 = scmp.eq.s32.totalorder %s24, 0
      %p93 = por %p91, %p92
      %s95 = sadd.s32 %s94, 1
      %p98 = scmp.eq.s32.totalorder %s18, 1
      %p99 = scmp.ne.s32.totalorder %s94, %s96
      %p100 = scmp.eq.s32.totalorder %s18, 0
      %p101 = por %p99, %p100
      %p102 = scmp.ne.s32.totalorder %s94, %s96
      %p103 = scmp.eq.s32.totalorder %s23, 1
      %p104 = por %p102, %p103
      %p105 = scmp.ne.s32.totalorder %s96, %s97
      %p106 = scmp.eq.s32.totalorder %s23, 0
      %p107 = por %p105, %p106
      %p108 = scmp.ne.s32.totalorder %s96, %s97
      %p109 = scmp.eq.s32.totalorder %s24, 1
      %p110 = por %p108, %p109
      %p112 = scmp.ne.s32.totalorder %s97, %s111
      %p113 = scmp.eq.s32.totalorder %s24, 0
      %p114 = por %p112, %p113
      %s116 = sadd.s32 %s115, 1
      %p119 = scmp.eq.s32.totalorder %s18, 1
      %p120 = scmp.ne.s32.totalorder %s115, %s117
      %p121 = scmp.eq.s32.totalorder %s18, 0
      %p122 = por %p120, %p121
      %p123 = scmp.ne.s32.totalorder %s115, %s117
      %p124 = scmp.eq.s32.totalorder %s23, 1
      %p125 = por %p123, %p124
      %p126 = scmp.ne.s32.totalorder %s117, %s118
      %p127 = scmp.eq.s32.totalorder %s23, 0
      %p128 = por %p126, %p127
      %p129 = scmp.ne.s32.totalorder %s117, %s118
      %p130 = scmp.eq.s32.totalorder %s24, 1
      %p131 = por %p129, %p130
      %p133 = scmp.ne.s32.totalorder %s118, %s132
      %p134 = scmp.eq.s32.totalorder %s24, 0
      %p135 = por %p133, %p134
      %s136 = ssub.s32 %s18, %s25
      %p137 = scmp.eq.s32.totalorder %s136, 0
      %s139 = sadd.s32 %s138, 1
      %s140 = scalar_select %p137, %s138, %s139
      %p143 = pneg %p137
      %p144 = scmp.eq.s32.totalorder %s18, 1
      %p145 = por %p143, %p144
      %p146 = scmp.ne.s32.totalorder %s138, %s141
      %p147 = scmp.eq.s32.totalorder %s18, 0
      %p148 = por %p146, %p147
      %p149 = scmp.ne.s32.totalorder %s138, %s141
      %p150 = scmp.eq.s32.totalorder %s23, 1
      %p151 = por %p149, %p150
      %p152 = scmp.ne.s32.totalorder %s141, %s142
      %p153 = scmp.eq.s32.totalorder %s23, 0
      %p154 = por %p152, %p153
      %p155 = scmp.ne.s32.totalorder %s141, %s142
      %p156 = scmp.eq.s32.totalorder %s24, 1
      %p157 = por %p155, %p156
      %p159 = scmp.ne.s32.totalorder %s142, %s158
      %p160 = scmp.eq.s32.totalorder %s24, 0
      %p161 = por %p159, %p160
      %p162 = scmp.le.s32.totalorder 1, %s18
      %p163 = scmp.lt.s32.totalorder %s18, 3
      %p164 = pnand %p162, %p163
      %p165 = pneg %p164
      // Predicated region
      $region9: #{tpu_custom_call.1} parent=5 // pred_check
        _
      $region10: #{tpu_custom_call.1} parent=5 // pred_check_branch
        %167 = sbr.rel (%p164) target = $region12
      $region11: #{tpu_custom_call.1} parent=5 // pred_region
        %s168 = ssub.s32 %s18, 1
        // Predicated region
        $region13: #{tpu_custom_call.1} parent=11 // pred_check
          %p169 = pneg %p65
        $region14: #{tpu_custom_call.1} parent=11 // pred_check_branch
          %171 = sbr.rel (%p169) target = $region16
        $region15: #{tpu_custom_call.1} parent=11 // pred_region
          %173 = vsyncadd [#allocation6], 0
          %s174 = sshll.u32 %s1, 4
          %s175 = int_to_ptr.hbm [resolvable:$true] %s174
          %s176 = sshll.u32 [#allocation5], 4
          %s177 = int_to_ptr.vmem [resolvable:$true] %s176
          %182 = dma.hbm_to_vmem [thread:$0]  %s175, 1024, %s177, [#allocation6], 64, 64, 4
        $region16: #{tpu_custom_call.1} parent=11 // pred_fallthru
          _
        // Predicated region
        $region17: #{tpu_custom_call.1} parent=11 // pred_check
          %p183 = pneg %p86
        $region18: #{tpu_custom_call.1} parent=11 // pred_check_branch
          %185 = sbr.rel (%p183) target = $region20
        $region19: #{tpu_custom_call.1} parent=11 // pred_region
          _
        $region20: #{tpu_custom_call.1} parent=11 // pred_fallthru
          _
        // Predicated region
        $region21: #{tpu_custom_call.1} parent=11 // pred_check
          %p186 = pneg %p107
        $region22: #{tpu_custom_call.1} parent=11 // pred_check_branch
          %188 = sbr.rel (%p186) target = $region24
        $region23: #{tpu_custom_call.1} parent=11 // pred_region
          %190 = vsyncadd [#allocation6], 0
          %s191 = sshll.u32 %s3, 4
          %s192 = int_to_ptr.hbm [resolvable:$true] %s191
          %s193 = sshll.u32 [#allocation7], 4
          %s194 = int_to_ptr.vmem [resolvable:$true] %s193
          %199 = dma.hbm_to_vmem [thread:$0]  %s192, 1024, %s194, [#allocation6], 64, 64, 4
        $region24: #{tpu_custom_call.1} parent=11 // pred_fallthru
          _
        // Predicated region
        $region25: #{tpu_custom_call.1} parent=11 // pred_check
          %p200 = pneg %p128
        $region26: #{tpu_custom_call.1} parent=11 // pred_check_branch
          %202 = sbr.rel (%p200) target = $region28
        $region27: #{tpu_custom_call.1} parent=11 // pred_region
          _
        $region28: #{tpu_custom_call.1} parent=11 // pred_fallthru
          _
      $region12: #{tpu_custom_call.1} parent=5 // pred_fallthru
        _
      %p203 = scmp.lt.s32.totalorder %s18, 2
      // Predicated region
      $region29: #{tpu_custom_call.1} parent=5 // pred_check
        %p204 = pneg %p203
      $region30: #{tpu_custom_call.1} parent=5 // pred_check_branch
        %206 = sbr.rel (%p204) target = $region32
      $region31: #{tpu_custom_call.1} parent=5 // pred_region
        // Predicated region
        $region33: #{tpu_custom_call.1} parent=31 // pred_check
          %p207 = pneg %p38
        $region34: #{tpu_custom_call.1} parent=31 // pred_check_branch
          %209 = sbr.rel (%p207) target = $region36
        $region35: #{tpu_custom_call.1} parent=31 // pred_region
          %s210 = sand.u32 %s28, 1
          %s211 = scalar_lea.sflag [#allocation3], %s210
          %s212 = sand.u32 %s28, 1
          %s213 = smul.addr %s212, 64
          %s214 = scalar_lea.vmem [#allocation2], %s213
          %s215 = smul.u32 16, %s18
          %217 = vsyncadd %s211, 0
          %s218 = smul.addr %s215, 4
          %s219 = scalar_lea.hbm %s0, %s218
          %s220 = sshll.u32 %s219, 4
          %s221 = int_to_ptr.hbm [resolvable:$true] %s220
          %s222 = sshll.u32 %s214, 4
          %s223 = int_to_ptr.vmem [resolvable:$true] %s222
          %228 = dma.hbm_to_vmem [thread:$0]  %s221, 1024, %s223, %s211, 64, 64, 4
        $region36: #{tpu_custom_call.1} parent=31 // pred_fallthru
          _
      $region32: #{tpu_custom_call.1} parent=5 // pred_fallthru
        _
      %p229 = scmp.le.s32.totalorder 1, %s18
      %p230 = scmp.lt.s32.totalorder %s18, 3
      %p231 = pnand %p229, %p230
      %p232 = pneg %p231
      // Predicated region
      $region37: #{tpu_custom_call.1} parent=5 // pred_check
        _
      $region38: #{tpu_custom_call.1} parent=5 // pred_check_branch
        %234 = sbr.rel (%p231) target = $region40
      $region39: #{tpu_custom_call.1} parent=5 // pred_region
        %s235 = ssub.s32 %s18, 1
        %s236 = sand.u32 %s31, 1
        %s237 = scalar_lea.sflag [#allocation3], %s236
        %s238 = sand.u32 %s31, 1
        %s239 = smul.addr %s238, 64
        %s240 = scalar_lea.vmem [#allocation2], %s239
        // Predicated region
        $region41: #{tpu_custom_call.1} parent=39 // pred_check
          %p241 = pneg %p44
        $region42: #{tpu_custom_call.1} parent=39 // pred_check_branch
          %243 = sbr.rel (%p241) target = $region44
        $region43: #{tpu_custom_call.1} parent=39 // pred_region
          %245 = dma.done %s237, 1024
        $region44: #{tpu_custom_call.1} parent=39 // pred_fallthru
          _
        // Predicated region
        $region45: #{tpu_custom_call.1} parent=39 // pred_check
          %p246 = pneg %p65
        $region46: #{tpu_custom_call.1} parent=39 // pred_check_branch
          %248 = sbr.rel (%p246) target = $region48
        $region47: #{tpu_custom_call.1} parent=39 // pred_region
          %250 = dma.done [#allocation6], 1024
        $region48: #{tpu_custom_call.1} parent=39 // pred_fallthru
          _
        // Predicated region
        $region49: #{tpu_custom_call.1} parent=39 // pred_check
          %p251 = pneg %p107
        $region50: #{tpu_custom_call.1} parent=39 // pred_check_branch
          %253 = sbr.rel (%p251) target = $region52
        $region51: #{tpu_custom_call.1} parent=39 // pred_region
          %255 = dma.done [#allocation6], 1024
        $region52: #{tpu_custom_call.1} parent=39 // pred_fallthru
          _
        %s256 = sand.u32 %s31, 1
        %s257 = scalar_lea.sflag [#allocation3], %s256
        %s258 = sand.u32 %s31, 1
        %s259 = smul.addr %s258, 64
        %s260 = scalar_lea.vmem [#allocation2], %s259
        %p261 = pneg %p44
        %p262 = pneg %p41
        %p263 = pneg %p65
        %p264 = pneg %p62
        %p265 = pneg %p86
        %p266 = pneg %p83
        %p267 = pneg %p107
        %p268 = pneg %p104
        %p269 = pneg %p128
        %p270 = pneg %p125
        %p271 = pneg %p154
        %p272 = pneg %p151
        %s273 = sand.u32 %s141, 1
        %s274 = scalar_lea.sflag [#allocation4], %s273
        %s275 = sand.u32 %s141, 1
        %s276 = smul.addr %s275, 64
        %s277 = scalar_lea.vmem [#allocation8], %s276
        %s278 = smul.u32 16, %s23
        %s279 = smul.u32 16, %s23
        %v280 = vld [vmem:[%s240] sm:$0xf]
        %v281 = vld [vmem:[%s240 + $0x4] sm:$0xf]
        %v282 = vld [vmem:[%s240 + $0x8] sm:$0xf]
        %v283 = vld [vmem:[%s240 + $0xc] sm:$0xf]
        %v284 = vld [vmem:[%s240 + $0x10] sm:$0xf]
        %v285 = vld [vmem:[%s240 + $0x14] sm:$0xf]
        %v286 = vld [vmem:[%s240 + $0x18] sm:$0xf]
        %v287 = vld [vmem:[%s240 + $0x1c] sm:$0xf]
        %v288 = vld [vmem:[%s240 + $0x20] sm:$0xf]
        %v289 = vld [vmem:[%s240 + $0x24] sm:$0xf]
        %v290 = vld [vmem:[%s240 + $0x28] sm:$0xf]
        %v291 = vld [vmem:[%s240 + $0x2c] sm:$0xf]
        %v292 = vld [vmem:[%s240 + $0x30] sm:$0xf]
        %v293 = vld [vmem:[%s240 + $0x34] sm:$0xf]
        %v294 = vld [vmem:[%s240 + $0x38] sm:$0xf]
        %v295 = vld [vmem:[%s240 + $0x3c] sm:$0xf]
        %v296 = vld [vmem:[#allocation5] sm:$0xf]
        %v297 = vld [vmem:[#allocation5 + $0x4] sm:$0xf]
        %v298 = vld [vmem:[#allocation5 + $0x8] sm:$0xf]
        %v299 = vld [vmem:[#allocation5 + $0xc] sm:$0xf]
        %v300 = vld [vmem:[#allocation5 + $0x10] sm:$0xf]
        %v301 = vld [vmem:[#allocation5 + $0x14] sm:$0xf]
        %v302 = vld [vmem:[#allocation5 + $0x18] sm:$0xf]
        %v303 = vld [vmem:[#allocation5 + $0x1c] sm:$0xf]
        %v304 = vld [vmem:[#allocation5 + $0x20] sm:$0xf]
        %v305 = vld [vmem:[#allocation5 + $0x24] sm:$0xf]
        %v306 = vld [vmem:[#allocation5 + $0x28] sm:$0xf]
        %v307 = vld [vmem:[#allocation5 + $0x2c] sm:$0xf]
        %v308 = vld [vmem:[#allocation5 + $0x30] sm:$0xf]
        %v309 = vld [vmem:[#allocation5 + $0x34] sm:$0xf]
        %v310 = vld [vmem:[#allocation5 + $0x38] sm:$0xf]
        %v311 = vld [vmem:[#allocation5 + $0x3c] sm:$0xf]
        %v312 = vld [vmem:[%s2] sm:$0x1]
        %v313 = vunpack.c.l.bf16 %v312
        %v314 = vperm.slane %v313, 0
        %v331 = vunpack.c.l.b16 %v280
        %v332 = vunpack.c.l.b16 %v281
        %v333 = vunpack.c.l.b16 %v282
        %v334 = vunpack.c.l.b16 %v283
        %v335 = vunpack.c.l.b16 %v284
        %v336 = vunpack.c.l.b16 %v285
        %v337 = vunpack.c.l.b16 %v286
        %v338 = vunpack.c.l.b16 %v287
        %v339 = vunpack.c.l.b16 %v288
        %v340 = vunpack.c.l.b16 %v289
        %v341 = vunpack.c.l.b16 %v290
        %v342 = vunpack.c.l.b16 %v291
        %v343 = vunpack.c.l.b16 %v292
        %v344 = vunpack.c.l.b16 %v293
        %v345 = vunpack.c.l.b16 %v294
        %v346 = vunpack.c.l.b16 %v295
        %v347 = vpack.c.b16 %v332, %v331
        %v348 = vpack.c.b16 %v334, %v333
        %v349 = vpack.c.b16 %v336, %v335
        %v350 = vpack.c.b16 %v338, %v337
        %v351 = vpack.c.b16 %v340, %v339
        %v352 = vpack.c.b16 %v342, %v341
        %v353 = vpack.c.b16 %v344, %v343
        %v354 = vpack.c.b16 %v346, %v345
        %v379 = vunpack.c.l.b16 %v296
        %v380 = vunpack.c.l.b16 %v297
        %v381 = vunpack.c.l.b16 %v298
        %v382 = vunpack.c.l.b16 %v299
        %v383 = vunpack.c.l.b16 %v300
        %v384 = vunpack.c.l.b16 %v301
        %v385 = vunpack.c.l.b16 %v302
        %v386 = vunpack.c.l.b16 %v303
        %v387 = vunpack.c.l.b16 %v304
        %v388 = vunpack.c.l.b16 %v305
        %v389 = vunpack.c.l.b16 %v306
        %v390 = vunpack.c.l.b16 %v307
        %v391 = vunpack.c.l.b16 %v308
        %v392 = vunpack.c.l.b16 %v309
        %v393 = vunpack.c.l.b16 %v310
        %v394 = vunpack.c.l.b16 %v311
        %v395 = vpack.c.b16 %v380, %v379
        %v396 = vpack.c.b16 %v382, %v381
        %v397 = vpack.c.b16 %v384, %v383
        %v398 = vpack.c.b16 %v386, %v385
        %v399 = vpack.c.b16 %v388, %v387
        %v400 = vpack.c.b16 %v390, %v389
        %v401 = vpack.c.b16 %v392, %v391
        %v402 = vpack.c.b16 %v394, %v393
        %411 = vmatpush.bf16.msra.mxu0 %v402
        %412 = vmatpush.bf16.msra.mxu0 %v401
        %413 = vmatpush.bf16.msra.mxu0 %v400
        %414 = vmatpush.bf16.msra.mxu0 %v399
        %415 = vmatpush.bf16.msra.mxu0 %v398
        %416 = vmatpush.bf16.msra.mxu0 %v397
        %417 = vmatpush.bf16.msra.mxu0 %v396
        %418 = vmatpush.bf16.msra.mxu0 %v395
        %419 = vmatmul.bf16.gmra.mxu0 %v347
        %v420 = vpop.f32.mrf.mxu0
        %v421 = vadd.f32 %v314, %v420
        %v422 = vpop.f32.mrf.mxu0
        %v423 = vadd.f32 %v314, %v422
        %424 = vmatmul.bf16.gmra.mxu0 %v348
        %v425 = vpop.f32.mrf.mxu0
        %v426 = vadd.f32 %v314, %v425
        %v427 = vpop.f32.mrf.mxu0
        %v428 = vadd.f32 %v314, %v427
        %429 = vmatmul.bf16.gmra.mxu0 %v349
        %v430 = vpop.f32.mrf.mxu0
        %v431 = vadd.f32 %v314, %v430
        %v432 = vpop.f32.mrf.mxu0
        %v433 = vadd.f32 %v314, %v432
        %434 = vmatmul.bf16.gmra.mxu0 %v350
        %v435 = vpop.f32.mrf.mxu0
        %v436 = vadd.f32 %v314, %v435
        %v437 = vpop.f32.mrf.mxu0
        %v438 = vadd.f32 %v314, %v437
        %439 = vmatmul.bf16.gmra.mxu0 %v351
        %v440 = vpop.f32.mrf.mxu0
        %v441 = vadd.f32 %v314, %v440
        %v442 = vpop.f32.mrf.mxu0
        %v443 = vadd.f32 %v314, %v442
        %444 = vmatmul.bf16.gmra.mxu0 %v352
        %v445 = vpop.f32.mrf.mxu0
        %v446 = vadd.f32 %v314, %v445
        %v447 = vpop.f32.mrf.mxu0
        %v448 = vadd.f32 %v314, %v447
        %449 = vmatmul.bf16.gmra.mxu0 %v353
        %v450 = vpop.f32.mrf.mxu0
        %v451 = vadd.f32 %v314, %v450
        %v452 = vpop.f32.mrf.mxu0
        %v453 = vadd.f32 %v314, %v452
        %454 = vmatmul.bf16.gmra.mxu0 %v354
        %v455 = vpop.f32.mrf.mxu0
        %v456 = vadd.f32 %v314, %v455
        %v457 = vpop.f32.mrf.mxu0
        %v458 = vadd.f32 %v314, %v457
        %459 = vdwg.mxu0
        %v460 = vmax.f32 %v421, 0.0
        %v461 = vmax.f32 %v423, 0.0
        %v462 = vmax.f32 %v426, 0.0
        %v463 = vmax.f32 %v428, 0.0
        %v464 = vmax.f32 %v431, 0.0
        %v465 = vmax.f32 %v433, 0.0
        %v466 = vmax.f32 %v436, 0.0
        %v467 = vmax.f32 %v438, 0.0
        %v468 = vmax.f32 %v441, 0.0
        %v469 = vmax.f32 %v443, 0.0
        %v470 = vmax.f32 %v446, 0.0
        %v471 = vmax.f32 %v448, 0.0
        %v472 = vmax.f32 %v451, 0.0
        %v473 = vmax.f32 %v453, 0.0
        %v474 = vmax.f32 %v456, 0.0
        %v475 = vmax.f32 %v458, 0.0
        %v476 = vpack.c.bf16 %v461, %v460
        %v477 = vpack.c.bf16 %v463, %v462
        %v478 = vpack.c.bf16 %v465, %v464
        %v479 = vpack.c.bf16 %v467, %v466
        %v480 = vpack.c.bf16 %v469, %v468
        %v481 = vpack.c.bf16 %v471, %v470
        %v482 = vpack.c.bf16 %v473, %v472
        %v483 = vpack.c.bf16 %v475, %v474
        %v484 = vld [vmem:[#allocation7] sm:$0xf]
        %v485 = vld [vmem:[#allocation7 + $0x4] sm:$0xf]
        %v486 = vld [vmem:[#allocation7 + $0x8] sm:$0xf]
        %v487 = vld [vmem:[#allocation7 + $0xc] sm:$0xf]
        %v488 = vld [vmem:[#allocation7 + $0x10] sm:$0xf]
        %v489 = vld [vmem:[#allocation7 + $0x14] sm:$0xf]
        %v490 = vld [vmem:[#allocation7 + $0x18] sm:$0xf]
        %v491 = vld [vmem:[#allocation7 + $0x1c] sm:$0xf]
        %v492 = vld [vmem:[#allocation7 + $0x20] sm:$0xf]
        %v493 = vld [vmem:[#allocation7 + $0x24] sm:$0xf]
        %v494 = vld [vmem:[#allocation7 + $0x28] sm:$0xf]
        %v495 = vld [vmem:[#allocation7 + $0x2c] sm:$0xf]
        %v496 = vld [vmem:[#allocation7 + $0x30] sm:$0xf]
        %v497 = vld [vmem:[#allocation7 + $0x34] sm:$0xf]
        %v498 = vld [vmem:[#allocation7 + $0x38] sm:$0xf]
        %v499 = vld [vmem:[#allocation7 + $0x3c] sm:$0xf]
        %v500 = vld [vmem:[%s4] sm:$0x1]
        %v501 = vunpack.c.l.bf16 %v500
        %v502 = vperm.slane %v501, 0
        %v519 = vunpack.c.l.b16 %v484
        %v520 = vunpack.c.l.b16 %v485
        %v521 = vunpack.c.l.b16 %v486
        %v522 = vunpack.c.l.b16 %v487
        %v523 = vunpack.c.l.b16 %v488
        %v524 = vunpack.c.l.b16 %v489
        %v525 = vunpack.c.l.b16 %v490
        %v526 = vunpack.c.l.b16 %v491
        %v527 = vunpack.c.l.b16 %v492
        %v528 = vunpack.c.l.b16 %v493
        %v529 = vunpack.c.l.b16 %v494
        %v530 = vunpack.c.l.b16 %v495
        %v531 = vunpack.c.l.b16 %v496
        %v532 = vunpack.c.l.b16 %v497
        %v533 = vunpack.c.l.b16 %v498
        %v534 = vunpack.c.l.b16 %v499
        %v535 = vpack.c.b16 %v520, %v519
        %v536 = vpack.c.b16 %v522, %v521
        %v537 = vpack.c.b16 %v524, %v523
        %v538 = vpack.c.b16 %v526, %v525
        %v539 = vpack.c.b16 %v528, %v527
        %v540 = vpack.c.b16 %v530, %v529
        %v541 = vpack.c.b16 %v532, %v531
        %v542 = vpack.c.b16 %v534, %v533
        %551 = vmatpush.bf16.msra.mxu0 %v542
        %552 = vmatpush.bf16.msra.mxu0 %v541
        %553 = vmatpush.bf16.msra.mxu0 %v540
        %554 = vmatpush.bf16.msra.mxu0 %v539
        %555 = vmatpush.bf16.msra.mxu0 %v538
        %556 = vmatpush.bf16.msra.mxu0 %v537
        %557 = vmatpush.bf16.msra.mxu0 %v536
        %558 = vmatpush.bf16.msra.mxu0 %v535
        %559 = vmatmul.bf16.gmra.mxu0 %v476
        %v560 = vpop.f32.mrf.mxu0
        %v561 = vadd.f32 %v502, %v560
        %v562 = vpop.f32.mrf.mxu0
        %v563 = vadd.f32 %v502, %v562
        %564 = vmatmul.bf16.gmra.mxu0 %v477
        %v565 = vpop.f32.mrf.mxu0
        %v566 = vadd.f32 %v502, %v565
        %v567 = vpop.f32.mrf.mxu0
        %v568 = vadd.f32 %v502, %v567
        %569 = vmatmul.bf16.gmra.mxu0 %v478
        %v570 = vpop.f32.mrf.mxu0
        %v571 = vadd.f32 %v502, %v570
        %v572 = vpop.f32.mrf.mxu0
        %v573 = vadd.f32 %v502, %v572
        %574 = vmatmul.bf16.gmra.mxu0 %v479
        %v575 = vpop.f32.mrf.mxu0
        %v576 = vadd.f32 %v502, %v575
        %v577 = vpop.f32.mrf.mxu0
        %v578 = vadd.f32 %v502, %v577
        %579 = vmatmul.bf16.gmra.mxu0 %v480
        %v580 = vpop.f32.mrf.mxu0
        %v581 = vadd.f32 %v502, %v580
        %v582 = vpop.f32.mrf.mxu0
        %v583 = vadd.f32 %v502, %v582
        %584 = vmatmul.bf16.gmra.mxu0 %v481
        %v585 = vpop.f32.mrf.mxu0
        %v586 = vadd.f32 %v502, %v585
        %v587 = vpop.f32.mrf.mxu0
        %v588 = vadd.f32 %v502, %v587
        %589 = vmatmul.bf16.gmra.mxu0 %v482
        %v590 = vpop.f32.mrf.mxu0
        %v591 = vadd.f32 %v502, %v590
        %v592 = vpop.f32.mrf.mxu0
        %v593 = vadd.f32 %v502, %v592
        %594 = vmatmul.bf16.gmra.mxu0 %v483
        %v595 = vpop.f32.mrf.mxu0
        %v596 = vadd.f32 %v502, %v595
        %v597 = vpop.f32.mrf.mxu0
        %v598 = vadd.f32 %v502, %v597
        %599 = vdwg.mxu0
        %v600 = vpack.c.bf16 %v561, %v561
        %v601 = vpack.c.bf16 %v563, %v563
        %v602 = vpack.c.bf16 %v566, %v566
        %v603 = vpack.c.bf16 %v568, %v568
        %v604 = vpack.c.bf16 %v571, %v571
        %v605 = vpack.c.bf16 %v573, %v573
        %v606 = vpack.c.bf16 %v576, %v576
        %v607 = vpack.c.bf16 %v578, %v578
        %v608 = vpack.c.bf16 %v581, %v581
        %v609 = vpack.c.bf16 %v583, %v583
        %v610 = vpack.c.bf16 %v586, %v586
        %v611 = vpack.c.bf16 %v588, %v588
        %v612 = vpack.c.bf16 %v591, %v591
        %v613 = vpack.c.bf16 %v593, %v593
        %v614 = vpack.c.bf16 %v596, %v596
        %v615 = vpack.c.bf16 %v598, %v598
        %616 = vst [vmem:[%s277] sm:$0xf] %v600
        %617 = vst [vmem:[%s277 + $0x4] sm:$0xf] %v601
        %618 = vst [vmem:[%s277 + $0x8] sm:$0xf] %v602
        %619 = vst [vmem:[%s277 + $0xc] sm:$0xf] %v603
        %620 = vst [vmem:[%s277 + $0x10] sm:$0xf] %v604
        %621 = vst [vmem:[%s277 + $0x14] sm:$0xf] %v605
        %622 = vst [vmem:[%s277 + $0x18] sm:$0xf] %v606
        %623 = vst [vmem:[%s277 + $0x1c] sm:$0xf] %v607
        %624 = vst [vmem:[%s277 + $0x20] sm:$0xf] %v608
        %625 = vst [vmem:[%s277 + $0x24] sm:$0xf] %v609
        %626 = vst [vmem:[%s277 + $0x28] sm:$0xf] %v610
        %627 = vst [vmem:[%s277 + $0x2c] sm:$0xf] %v611
        %628 = vst [vmem:[%s277 + $0x30] sm:$0xf] %v612
        %629 = vst [vmem:[%s277 + $0x34] sm:$0xf] %v613
        %630 = vst [vmem:[%s277 + $0x38] sm:$0xf] %v614
        %631 = vst [vmem:[%s277 + $0x3c] sm:$0xf] %v615
        %s632 = sand.u32 %s141, 1
        %s633 = scalar_lea.sflag [#allocation4], %s632
        %s634 = sand.u32 %s141, 1
        %s635 = smul.addr %s634, 64
        %s636 = scalar_lea.vmem [#allocation8], %s635
        // Predicated region
        $region53: #{tpu_custom_call.1} parent=39 // pred_check
          %p637 = pneg %p151
        $region54: #{tpu_custom_call.1} parent=39 // pred_check_branch
          %639 = sbr.rel (%p637) target = $region56
        $region55: #{tpu_custom_call.1} parent=39 // pred_region
          %s640 = smul.u32 16, %s23
          %642 = vsyncadd %s633, 0
          %s643 = smul.addr %s640, 4
          %s644 = scalar_lea.hbm %s5, %s643
          %s645 = sshll.u32 %s636, 4
          %s646 = int_to_ptr.vmem [resolvable:$true] %s645
          %s647 = sshll.u32 %s644, 4
          %s648 = int_to_ptr.hbm [resolvable:$true] %s647
          %653 = dma.vmem_to_hbm [thread:$0]  %s646, 1024, %s648, %s633, 64, 64, 4
        $region56: #{tpu_custom_call.1} parent=39 // pred_fallthru
          _
      $region40: #{tpu_custom_call.1} parent=5 // pred_fallthru
        _
      %p654 = scmp.le.s32.totalorder 2, %s18
      // Predicated region
      $region57: #{tpu_custom_call.1} parent=5 // pred_check
        %p655 = pneg %p654
      $region58: #{tpu_custom_call.1} parent=5 // pred_check_branch
        %657 = sbr.rel (%p655) target = $region60
      $region59: #{tpu_custom_call.1} parent=5 // pred_region
        %s658 = ssub.s32 %s18, 2
        // Predicated region
        $region61: #{tpu_custom_call.1} parent=59 // pred_check
          %p659 = pneg %p157
        $region62: #{tpu_custom_call.1} parent=59 // pred_check_branch
          %661 = sbr.rel (%p659) target = $region64
        $region63: #{tpu_custom_call.1} parent=59 // pred_region
          %s662 = sand.u32 %s142, 1
          %s663 = scalar_lea.sflag [#allocation4], %s662
          %s664 = sand.u32 %s142, 1
          %s665 = smul.addr %s664, 64
          %s666 = scalar_lea.vmem [#allocation8], %s665
          %668 = dma.done %s663, 1024
        $region64: #{tpu_custom_call.1} parent=59 // pred_fallthru
          _
      $region60: #{tpu_custom_call.1} parent=5 // pred_fallthru
        _
    $region6: #{tpu_custom_call.1} parent=1 // loop_footer
      %s22 = sadd.s32 1, %s18
    $region7: #{tpu_custom_call.1} parent=1 // loop_footer_branch
      %17 = sbr.rel target = $region3
    $region8: #{tpu_custom_call.1} parent=1 // loop_exit
      _
    %669 = vsyncpa [#allocation3], 1
    %s670 = scalar_lea.sflag [#allocation3], 1
    %671 = vsyncpa %s670, 1
    %672 = vsyncpa [#allocation6], 1
    %673 = vsyncpa [#allocation4], 1
    %s674 = scalar_lea.sflag [#allocation4], 1
    %675 = vsyncpa %s674, 1

// kernel: tpu_custom_call.1
$region0: #{tpu_custom_call.1}
  #allocation0 [shape = 'u32[]', space=smem, size = 0x4, offset = 0x4, fixed_abs, tag = 'smem constant byte address 0x4 - core index']
  #allocation1 [shape = 'u32[72,128]{1,0:T(1,128)}', space=vmem, size = 0x9000, scoped, tag = 'internal scratch']
  %s0 = inlined_call_operand.hbm [shape: bf16[256,128], index: 0, kind: input, shape index: {}]
  %s1 = inlined_call_operand.hbm [shape: bf16[128,128], index: 1, kind: input, shape index: {}]
  %s2 = inlined_call_operand.vmem [shape: bf16[1,128], index: 2, kind: input, shape index: {}]
  %s3 = inlined_call_operand.hbm [shape: bf16[128,128], index: 3, kind: input, shape index: {}]
  %s4 = inlined_call_operand.vmem [shape: bf16[1,128], index: 4, kind: input, shape index: {}]
  %s5 = inlined_call_operand.hbm [shape: bf16[256,128], index: 5, kind: output, shape index: {}]
  %s6 = sld [smem:[#allocation0]]
  $region65: #{tpu_custom_call.1} parent=0
    _
  %s8 = ssub.s32 1, %s6
  %s9 = scalar_select 0, %s8, %s6
  $region1: #{tpu_custom_call.1} parent=0
    #allocation2 [shape = 'u8[65536]{0}', space=vmem, size = 0x10000, scoped, tag = 'input window, operand 0']
    #allocation3 [shape = 's32[2]{0}', space=sflag, size = 0x8, scoped, tag = 'scoped memory for tpu_custom_call.1']
    #allocation4 [shape = 's32[2]{0}', space=sflag, size = 0x8, scoped, tag = 'scoped memory for tpu_custom_call.1']
    #allocation5 [shape = 'u8[32768]{0}', space=vmem, size = 0x8000, scoped, tag = 'input window, operand 1, single buffered']
    #allocation6 [shape = 's32[1]{0}', space=sflag, size = 0x4, scoped, tag = 'scoped memory for tpu_custom_call.1']
    #allocation7 [shape = 'u8[32768]{0}', space=vmem, size = 0x8000, scoped, tag = 'input window, operand 3, single buffered']
    #allocation8 [shape = 'u8[65536]{0}', space=vmem, size = 0x10000, scoped, tag = 'output window, operand 0']
    %10 = vsyncpa [#allocation3], 0
    %s11 = scalar_lea.sflag [#allocation3], 1
    %12 = vsyncpa %s11, 0
    %13 = vsyncpa [#allocation6], 0
    %14 = vsyncpa [#allocation4], 0
    %s15 = scalar_lea.sflag [#allocation4], 1
    %16 = vsyncpa %s15, 0
    loop: start=0, step=1, limit=4
    $region2: #{tpu_custom_call.1} parent=1 // loop_pre_header
      _
    $region3: #{tpu_custom_call.1} parent=1 // loop_header
      %s18 = sphi 0, %s22
      %p19 = scmp.ge.s32.totalorder %s18, 4
      %s28 = sphi 0, %s30
      %s31 = sphi 0, %s28
      %s32 = sphi 0, %s31
      %s48 = sphi 0, %s32
      %s52 = sphi 0, %s52
      %s54 = sphi 0, %s52
      %s55 = sphi 0, %s54
      %s69 = sphi 0, %s55
      %s73 = sphi 0, %s73
      %s75 = sphi 0, %s73
      %s76 = sphi 0, %s75
      %s90 = sphi 0, %s76
      %s94 = sphi 0, %s94
      %s96 = sphi 0, %s94
      %s97 = sphi 0, %s96
      %s111 = sphi 0, %s97
      %s115 = sphi 0, %s115
      %s117 = sphi 0, %s115
      %s118 = sphi 0, %s117
      %s132 = sphi 0, %s118
      %s138 = sphi 0, %s140
      %s141 = sphi 0, %s138
      %s142 = sphi 0, %s141
      %s158 = sphi 0, %s142
    $region4: #{tpu_custom_call.1} parent=1 // loop_header_branch
      %21 = sbr.rel (%p19) target = $region8
    $region5: #{tpu_custom_call.1} parent=1 // loop_body
      %s23 = ssub.s32 %s18, 1
      %s24 = ssub.s32 %s18, 2
      %s25 = sadd.s32 %s18, 1
      %s26 = ssub.s32 %s18, %s25
      %p27 = scmp.eq.s32.totalorder %s26, 0
      %s29 = sadd.s32 %s28, 1
      %s30 = scalar_select %p27, %s28, %s29
      %p33 = pneg %p27
      %p34 = scmp.eq.s32.totalorder %s18, 1
      %p35 = por %p33, %p34
      %p36 = scmp.ne.s32.totalorder %s28, %s31
      %p37 = scmp.eq.s32.totalorder %s18, 0
      %p38 = por %p36, %p37
      %p39 = scmp.ne.s32.totalorder %s28, %s31
      %p40 = scmp.eq.s32.totalorder %s23, 1
      %p41 = por %p39, %p40
      %p42 = scmp.ne.s32.totalorder %s31, %s32
      %p43 = scmp.eq.s32.totalorder %s23, 0
      %p44 = por %p42, %p43
      %p45 = scmp.ne.s32.totalorder %s31, %s32
      %p46 = scmp.eq.s32.totalorder %s24, 1
      %p47 = por %p45, %p46
      %p49 = scmp.ne.s32.totalorder %s32, %s48
      %p50 = scmp.eq.s32.totalorder %s24, 0
      %p51 = por %p49, %p50
      %s53 = sadd.s32 %s52, 1
      %p56 = scmp.eq.s32.totalorder %s18, 1
      %p57 = scmp.ne.s32.totalorder %s52, %s54
      %p58 = scmp.eq.s32.totalorder %s18, 0
      %p59 = por %p57, %p58
      %p60 = scmp.ne.s32.totalorder %s52, %s54
      %p61 = scmp.eq.s32.totalorder %s23, 1
      %p62 = por %p60, %p61
      %p63 = scmp.ne.s32.totalorder %s54, %s55
      %p64 = scmp.eq.s32.totalorder %s23, 0
      %p65 = por %p63, %p64
      %p66 = scmp.ne.s32.totalorder %s54, %s55
      %p67 = scmp.eq.s32.totalorder %s24, 1
      %p68 = por %p66, %p67
      %p70 = scmp.ne.s32.totalorder %s55, %s69
      %p71 = scmp.eq.s32.totalorder %s24, 0
      %p72 = por %p70, %p71
      %s74 = sadd.s32 %s73, 1
      %p77 = scmp.eq.s32.totalorder %s18, 1
      %p78 = scmp.ne.s32.totalorder %s73, %s75
      %p79 = scmp.eq.s32.totalorder %s18, 0
      %p80 = por %p78, %p79
      %p81 = scmp.ne.s32.totalorder %s73, %s75
      %p82 = scmp.eq.s32.totalorder %s23, 1
      %p83 = por %p81, %p82
      %p84 = scmp.ne.s32.totalorder %s75, %s76
      %p85 = scmp.eq.s32.totalorder %s23, 0
      %p86 = por %p84, %p85
      %p87 = scmp.ne.s32.totalorder %s75, %s76
      %p88 = scmp.eq.s32.totalorder %s24, 1
      %p89 = por %p87, %p88
      %p91 = scmp.ne.s32.totalorder %s76, %s90
      %p92 = scmp.eq.s32.totalorder %s24, 0
      %p93 = por %p91, %p92
      %s95 = sadd.s32 %s94, 1
      %p98 = scmp.eq.s32.totalorder %s18, 1
      %p99 = scmp.ne.s32.totalorder %s94, %s96
      %p100 = scmp.eq.s32.totalorder %s18, 0
      %p101 = por %p99, %p100
      %p102 = scmp.ne.s32.totalorder %s94, %s96
      %p103 = scmp.eq.s32.totalorder %s23, 1
      %p104 = por %p102, %p103
      %p105 = scmp.ne.s32.totalorder %s96, %s97
      %p106 = scmp.eq.s32.totalorder %s23, 0
      %p107 = por %p105, %p106
      %p108 = scmp.ne.s32.totalorder %s96, %s97
      %p109 = scmp.eq.s32.totalorder %s24, 1
      %p110 = por %p108, %p109
      %p112 = scmp.ne.s32.totalorder %s97, %s111
      %p113 = scmp.eq.s32.totalorder %s24, 0
      %p114 = por %p112, %p113
      %s116 = sadd.s32 %s115, 1
      %p119 = scmp.eq.s32.totalorder %s18, 1
      %p120 = scmp.ne.s32.totalorder %s115, %s117
      %p121 = scmp.eq.s32.totalorder %s18, 0
      %p122 = por %p120, %p121
      %p123 = scmp.ne.s32.totalorder %s115, %s117
      %p124 = scmp.eq.s32.totalorder %s23, 1
      %p125 = por %p123, %p124
      %p126 = scmp.ne.s32.totalorder %s117, %s118
      %p127 = scmp.eq.s32.totalorder %s23, 0
      %p128 = por %p126, %p127
      %p129 = scmp.ne.s32.totalorder %s117, %s118
      %p130 = scmp.eq.s32.totalorder %s24, 1
      %p131 = por %p129, %p130
      %p133 = scmp.ne.s32.totalorder %s118, %s132
      %p134 = scmp.eq.s32.totalorder %s24, 0
      %p135 = por %p133, %p134
      %s136 = ssub.s32 %s18, %s25
      %p137 = scmp.eq.s32.totalorder %s136, 0
      %s139 = sadd.s32 %s138, 1
      %s140 = scalar_select %p137, %s138, %s139
      %p143 = pneg %p137
      %p144 = scmp.eq.s32.totalorder %s18, 1
      %p145 = por %p143, %p144
      %p146 = scmp.ne.s32.totalorder %s138, %s141
      %p147 = scmp.eq.s32.totalorder %s18, 0
      %p148 = por %p146, %p147
      %p149 = scmp.ne.s32.totalorder %s138, %s141
      %p150 = scmp.eq.s32.totalorder %s23, 1
      %p151 = por %p149, %p150
      %p152 = scmp.ne.s32.totalorder %s141, %s142
      %p153 = scmp.eq.s32.totalorder %s23, 0
      %p154 = por %p152, %p153
      %p155 = scmp.ne.s32.totalorder %s141, %s142
      %p156 = scmp.eq.s32.totalorder %s24, 1
      %p157 = por %p155, %p156
      %p159 = scmp.ne.s32.totalorder %s142, %s158
      %p160 = scmp.eq.s32.totalorder %s24, 0
      %p161 = por %p159, %p160
      %p162 = scmp.le.s32.totalorder 1, %s18
      %p163 = scmp.lt.s32.totalorder %s18, 3
      %p164 = pnand %p162, %p163
      %p165 = pneg %p164
      // Predicated region
      $region9: #{tpu_custom_call.1} parent=5 // pred_check
        _
      $region10: #{tpu_custom_call.1} parent=5 // pred_check_branch
        %167 = sbr.rel (%p164) target = $region12
      $region11: #{tpu_custom_call.1} parent=5 // pred_region
        %s168 = ssub.s32 %s18, 1
        // Predicated region
        $region13: #{tpu_custom_call.1} parent=11 // pred_check
          %p169 = pneg %p65
        $region14: #{tpu_custom_call.1} parent=11 // pred_check_branch
          %171 = sbr.rel (%p169) target = $region16
        $region15: #{tpu_custom_call.1} parent=11 // pred_region
          %173 = vsyncadd [#allocation6], 0
          %s174 = sshll.u32 %s1, 4
          %s175 = int_to_ptr.hbm [resolvable:$true] %s174
          %s176 = sshll.u32 [#allocation5], 4
          %s177 = int_to_ptr.vmem [resolvable:$true] %s176
          %182 = dma.hbm_to_vmem [thread:$0]  %s175, 1024, %s177, [#allocation6], 64, 64, 4
        $region16: #{tpu_custom_call.1} parent=11 // pred_fallthru
          _
        // Predicated region
        $region17: #{tpu_custom_call.1} parent=11 // pred_check
          %p183 = pneg %p86
        $region18: #{tpu_custom_call.1} parent=11 // pred_check_branch
          %185 = sbr.rel (%p183) target = $region20
        $region19: #{tpu_custom_call.1} parent=11 // pred_region
          _
        $region20: #{tpu_custom_call.1} parent=11 // pred_fallthru
          _
        // Predicated region
        $region21: #{tpu_custom_call.1} parent=11 // pred_check
          %p186 = pneg %p107
        $region22: #{tpu_custom_call.1} parent=11 // pred_check_branch
          %188 = sbr.rel (%p186) target = $region24
        $region23: #{tpu_custom_call.1} parent=11 // pred_region
          %190 = vsyncadd [#allocation6], 0
          %s191 = sshll.u32 %s3, 4
          %s192 = int_to_ptr.hbm [resolvable:$true] %s191
          %s193 = sshll.u32 [#allocation7], 4
          %s194 = int_to_ptr.vmem [resolvable:$true] %s193
          %199 = dma.hbm_to_vmem [thread:$0]  %s192, 1024, %s194, [#allocation6], 64, 64, 4
        $region24: #{tpu_custom_call.1} parent=11 // pred_fallthru
          _
        // Predicated region
        $region25: #{tpu_custom_call.1} parent=11 // pred_check
          %p200 = pneg %p128
        $region26: #{tpu_custom_call.1} parent=11 // pred_check_branch
          %202 = sbr.rel (%p200) target = $region28
        $region27: #{tpu_custom_call.1} parent=11 // pred_region
          _
        $region28: #{tpu_custom_call.1} parent=11 // pred_fallthru
          _
      $region12: #{tpu_custom_call.1} parent=5 // pred_fallthru
        _
      %p203 = scmp.lt.s32.totalorder %s18, 2
      // Predicated region
      $region29: #{tpu_custom_call.1} parent=5 // pred_check
        %p204 = pneg %p203
      $region30: #{tpu_custom_call.1} parent=5 // pred_check_branch
        %206 = sbr.rel (%p204) target = $region32
      $region31: #{tpu_custom_call.1} parent=5 // pred_region
        // Predicated region
        $region33: #{tpu_custom_call.1} parent=31 // pred_check
          %p207 = pneg %p38
        $region34: #{tpu_custom_call.1} parent=31 // pred_check_branch
          %209 = sbr.rel (%p207) target = $region36
        $region35: #{tpu_custom_call.1} parent=31 // pred_region
          %s210 = sand.u32 %s28, 1
          %s211 = scalar_lea.sflag [#allocation3], %s210
          %s212 = sand.u32 %s28, 1
          %s213 = smul.addr %s212, 64
          %s214 = scalar_lea.vmem [#allocation2], %s213
          %s215 = smul.u32 16, %s18
          %217 = vsyncadd %s211, 0
          %s218 = smul.addr %s215, 4
          %s219 = scalar_lea.hbm %s0, %s218
          %s220 = sshll.u32 %s219, 4
          %s221 = int_to_ptr.hbm [resolvable:$true] %s220
          %s222 = sshll.u32 %s214, 4
          %s223 = int_to_ptr.vmem [resolvable:$true] %s222
          %228 = dma.hbm_to_vmem [thread:$0]  %s221, 1024, %s223, %s211, 64, 64, 4
        $region36: #{tpu_custom_call.1} parent=31 // pred_fallthru
          _
      $region32: #{tpu_custom_call.1} parent=5 // pred_fallthru
        _
      %p229 = scmp.le.s32.totalorder 1, %s18
      %p230 = scmp.lt.s32.totalorder %s18, 3
      %p231 = pnand %p229, %p230
      %p232 = pneg %p231
      // Predicated region
      $region37: #{tpu_custom_call.1} parent=5 // pred_check
        _
      $region38: #{tpu_custom_call.1} parent=5 // pred_check_branch
        %234 = sbr.rel (%p231) target = $region40
      $region39: #{tpu_custom_call.1} parent=5 // pred_region
        %s235 = ssub.s32 %s18, 1
        %s236 = sand.u32 %s31, 1
        %s237 = scalar_lea.sflag [#allocation3], %s236
        %s238 = sand.u32 %s31, 1
        %s239 = smul.addr %s238, 64
        %s240 = scalar_lea.vmem [#allocation2], %s239
        // Predicated region
        $region41: #{tpu_custom_call.1} parent=39 // pred_check
          %p241 = pneg %p44
        $region42: #{tpu_custom_call.1} parent=39 // pred_check_branch
          %243 = sbr.rel (%p241) target = $region44
        $region43: #{tpu_custom_call.1} parent=39 // pred_region
          %245 = dma.done %s237, 1024
        $region44: #{tpu_custom_call.1} parent=39 // pred_fallthru
          _
        // Predicated region
        $region45: #{tpu_custom_call.1} parent=39 // pred_check
          %p246 = pneg %p65
        $region46: #{tpu_custom_call.1} parent=39 // pred_check_branch
          %248 = sbr.rel (%p246) target = $region48
        $region47: #{tpu_custom_call.1} parent=39 // pred_region
          %250 = dma.done [#allocation6], 1024
        $region48: #{tpu_custom_call.1} parent=39 // pred_fallthru
          _
        // Predicated region
        $region49: #{tpu_custom_call.1} parent=39 // pred_check
          %p251 = pneg %p107
        $region50: #{tpu_custom_call.1} parent=39 // pred_check_branch
          %253 = sbr.rel (%p251) target = $region52
        $region51: #{tpu_custom_call.1} parent=39 // pred_region
          %255 = dma.done [#allocation6], 1024
        $region52: #{tpu_custom_call.1} parent=39 // pred_fallthru
          _
        %s256 = sand.u32 %s31, 1
        %s257 = scalar_lea.sflag [#allocation3], %s256
        %s258 = sand.u32 %s31, 1
        %s259 = smul.addr %s258, 64
        %s260 = scalar_lea.vmem [#allocation2], %s259
        %p261 = pneg %p44
        %p262 = pneg %p41
        %p263 = pneg %p65
        %p264 = pneg %p62
        %p265 = pneg %p86
        %p266 = pneg %p83
        %p267 = pneg %p107
        %p268 = pneg %p104
        %p269 = pneg %p128
        %p270 = pneg %p125
        %p271 = pneg %p154
        %p272 = pneg %p151
        %s273 = sand.u32 %s141, 1
        %s274 = scalar_lea.sflag [#allocation4], %s273
        %s275 = sand.u32 %s141, 1
        %s276 = smul.addr %s275, 64
        %s277 = scalar_lea.vmem [#allocation8], %s276
        %s278 = smul.u32 16, %s23
        %s279 = smul.u32 16, %s23
        %v280 = vld [vmem:[%s240] sm:$0xf]
        %v281 = vld [vmem:[%s240 + $0x4] sm:$0xf]
        %v282 = vld [vmem:[%s240 + $0x8] sm:$0xf]
        %v283 = vld [vmem:[%s240 + $0xc] sm:$0xf]
        %v284 = vld [vmem:[%s240 + $0x10] sm:$0xf]
        %v285 = vld [vmem:[%s240 + $0x14] sm:$0xf]
        %v286 = vld [vmem:[%s240 + $0x18] sm:$0xf]
        %v287 = vld [vmem:[%s240 + $0x1c] sm:$0xf]
        %v288 = vld [vmem:[%s240 + $0x20] sm:$0xf]
        %v289 = vld [vmem:[%s240 + $0x24] sm:$0xf]
        %v290 = vld [vmem:[%s240 + $0x28] sm:$0xf]
        %v291 = vld [vmem:[%s240 + $0x2c] sm:$0xf]
        %v292 = vld [vmem:[%s240 + $0x30] sm:$0xf]
        %v293 = vld [vmem:[%s240 + $0x34] sm:$0xf]
        %v294 = vld [vmem:[%s240 + $0x38] sm:$0xf]
        %v295 = vld [vmem:[%s240 + $0x3c] sm:$0xf]
        %v296 = vld [vmem:[#allocation5] sm:$0xf]
        %v297 = vld [vmem:[#allocation5 + $0x4] sm:$0xf]
        %v298 = vld [vmem:[#allocation5 + $0x8] sm:$0xf]
        %v299 = vld [vmem:[#allocation5 + $0xc] sm:$0xf]
        %v300 = vld [vmem:[#allocation5 + $0x10] sm:$0xf]
        %v301 = vld [vmem:[#allocation5 + $0x14] sm:$0xf]
        %v302 = vld [vmem:[#allocation5 + $0x18] sm:$0xf]
        %v303 = vld [vmem:[#allocation5 + $0x1c] sm:$0xf]
        %v304 = vld [vmem:[#allocation5 + $0x20] sm:$0xf]
        %v305 = vld [vmem:[#allocation5 + $0x24] sm:$0xf]
        %v306 = vld [vmem:[#allocation5 + $0x28] sm:$0xf]
        %v307 = vld [vmem:[#allocation5 + $0x2c] sm:$0xf]
        %v308 = vld [vmem:[#allocation5 + $0x30] sm:$0xf]
        %v309 = vld [vmem:[#allocation5 + $0x34] sm:$0xf]
        %v310 = vld [vmem:[#allocation5 + $0x38] sm:$0xf]
        %v311 = vld [vmem:[#allocation5 + $0x3c] sm:$0xf]
        %v312 = vld [vmem:[%s2] sm:$0x1]
        %v313 = vunpack.c.l.bf16 %v312
        %v314 = vperm.slane %v313, 0
        %v331 = vunpack.c.l.b16 %v280
        %v332 = vunpack.c.l.b16 %v281
        %v333 = vunpack.c.l.b16 %v282
        %v334 = vunpack.c.l.b16 %v283
        %v335 = vunpack.c.l.b16 %v284
        %v336 = vunpack.c.l.b16 %v285
        %v337 = vunpack.c.l.b16 %v286
        %v338 = vunpack.c.l.b16 %v287
        %v339 = vunpack.c.l.b16 %v288
        %v340 = vunpack.c.l.b16 %v289
        %v341 = vunpack.c.l.b16 %v290
        %v342 = vunpack.c.l.b16 %v291
        %v343 = vunpack.c.l.b16 %v292
        %v344 = vunpack.c.l.b16 %v293
        %v345 = vunpack.c.l.b16 %v294
        %v346 = vunpack.c.l.b16 %v295
        %v347 = vpack.c.b16 %v332, %v331
        %v348 = vpack.c.b16 %v334, %v333
        %v349 = vpack.c.b16 %v336, %v335
        %v350 = vpack.c.b16 %v338, %v337
        %v351 = vpack.c.b16 %v340, %v339
        %v352 = vpack.c.b16 %v342, %v341
        %v353 = vpack.c.b16 %v344, %v343
        %v354 = vpack.c.b16 %v346, %v345
        %v379 = vunpack.c.l.b16 %v296
        %v380 = vunpack.c.l.b16 %v297
        %v381 = vunpack.c.l.b16 %v298
        %v382 = vunpack.c.l.b16 %v299
        %v383 = vunpack.c.l.b16 %v300
        %v384 = vunpack.c.l.b16 %v301
        %v385 = vunpack.c.l.b16 %v302
        %v386 = vunpack.c.l.b16 %v303
        %v387 = vunpack.c.l.b16 %v304
        %v388 = vunpack.c.l.b16 %v305
        %v389 = vunpack.c.l.b16 %v306
        %v390 = vunpack.c.l.b16 %v307
        %v391 = vunpack.c.l.b16 %v308
        %v392 = vunpack.c.l.b16 %v309
        %v393 = vunpack.c.l.b16 %v310
        %v394 = vunpack.c.l.b16 %v311
        %v395 = vpack.c.b16 %v380, %v379
        %v396 = vpack.c.b16 %v382, %v381
        %v397 = vpack.c.b16 %v384, %v383
        %v398 = vpack.c.b16 %v386, %v385
        %v399 = vpack.c.b16 %v388, %v387
        %v400 = vpack.c.b16 %v390, %v389
        %v401 = vpack.c.b16 %v392, %v391
        %v402 = vpack.c.b16 %v394, %v393
        %411 = vmatpush.bf16.msra.mxu0 %v402
        %412 = vmatpush.bf16.msra.mxu0 %v401
        %413 = vmatpush.bf16.msra.mxu0 %v400
        %414 = vmatpush.bf16.msra.mxu0 %v399
        %415 = vmatpush.bf16.msra.mxu0 %v398
        %416 = vmatpush.bf16.msra.mxu0 %v397
        %417 = vmatpush.bf16.msra.mxu0 %v396
        %418 = vmatpush.bf16.msra.mxu0 %v395
        %419 = vmatmul.bf16.gmra.mxu0 %v347
        %v420 = vpop.f32.mrf.mxu0
        %v421 = vadd.f32 %v314, %v420
        %v422 = vpop.f32.mrf.mxu0
        %v423 = vadd.f32 %v314, %v422
        %424 = vmatmul.bf16.gmra.mxu0 %v348
        %v425 = vpop.f32.mrf.mxu0
        %v426 = vadd.f32 %v314, %v425
        %v427 = vpop.f32.mrf.mxu0
        %v428 = vadd.f32 %v314, %v427
        %429 = vmatmul.bf16.gmra.mxu0 %v349
        %v430 = vpop.f32.mrf.mxu0
        %v431 = vadd.f32 %v314, %v430
        %v432 = vpop.f32.mrf.mxu0
        %v433 = vadd.f32 %v314, %v432
        %434 = vmatmul.bf16.gmra.mxu0 %v350
        %v435 = vpop.f32.mrf.mxu0
        %v436 = vadd.f32 %v314, %v435
        %v437 = vpop.f32.mrf.mxu0
        %v438 = vadd.f32 %v314, %v437
        %439 = vmatmul.bf16.gmra.mxu0 %v351
        %v440 = vpop.f32.mrf.mxu0
        %v441 = vadd.f32 %v314, %v440
        %v442 = vpop.f32.mrf.mxu0
        %v443 = vadd.f32 %v314, %v442
        %444 = vmatmul.bf16.gmra.mxu0 %v352
        %v445 = vpop.f32.mrf.mxu0
        %v446 = vadd.f32 %v314, %v445
        %v447 = vpop.f32.mrf.mxu0
        %v448 = vadd.f32 %v314, %v447
        %449 = vmatmul.bf16.gmra.mxu0 %v353
        %v450 = vpop.f32.mrf.mxu0
        %v451 = vadd.f32 %v314, %v450
        %v452 = vpop.f32.mrf.mxu0
        %v453 = vadd.f32 %v314, %v452
        %454 = vmatmul.bf16.gmra.mxu0 %v354
        %v455 = vpop.f32.mrf.mxu0
        %v456 = vadd.f32 %v314, %v455
        %v457 = vpop.f32.mrf.mxu0
        %v458 = vadd.f32 %v314, %v457
        %459 = vdwg.mxu0
        %v460 = vmax.f32 %v421, 0.0
        %v461 = vmax.f32 %v423, 0.0
        %v462 = vmax.f32 %v426, 0.0
        %v463 = vmax.f32 %v428, 0.0
        %v464 = vmax.f32 %v431, 0.0
        %v465 = vmax.f32 %v433, 0.0
        %v466 = vmax.f32 %v436, 0.0
        %v467 = vmax.f32 %v438, 0.0
        %v468 = vmax.f32 %v441, 0.0
        %v469 = vmax.f32 %v443, 0.0
        %v470 = vmax.f32 %v446, 0.0
        %v471 = vmax.f32 %v448, 0.0
        %v472 = vmax.f32 %v451, 0.0
        %v473 = vmax.f32 %v453, 0.0
        %v474 = vmax.f32 %v456, 0.0
        %v475 = vmax.f32 %v458, 0.0
        %v476 = vpack.c.bf16 %v461, %v460
        %v477 = vpack.c.bf16 %v463, %v462
        %v478 = vpack.c.bf16 %v465, %v464
        %v479 = vpack.c.bf16 %v467, %v466
        %v480 = vpack.c.bf16 %v469, %v468
        %v481 = vpack.c.bf16 %v471, %v470
        %v482 = vpack.c.bf16 %v473, %v472
        %v483 = vpack.c.bf16 %v475, %v474
        %v484 = vld [vmem:[#allocation7] sm:$0xf]
        %v485 = vld [vmem:[#allocation7 + $0x4] sm:$0xf]
        %v486 = vld [vmem:[#allocation7 + $0x8] sm:$0xf]
        %v487 = vld [vmem:[#allocation7 + $0xc] sm:$0xf]
        %v488 = vld [vmem:[#allocation7 + $0x10] sm:$0xf]
        %v489 = vld [vmem:[#allocation7 + $0x14] sm:$0xf]
        %v490 = vld [vmem:[#allocation7 + $0x18] sm:$0xf]
        %v491 = vld [vmem:[#allocation7 + $0x1c] sm:$0xf]
        %v492 = vld [vmem:[#allocation7 + $0x20] sm:$0xf]
        %v493 = vld [vmem:[#allocation7 + $0x24] sm:$0xf]
        %v494 = vld [vmem:[#allocation7 + $0x28] sm:$0xf]
        %v495 = vld [vmem:[#allocation7 + $0x2c] sm:$0xf]
        %v496 = vld [vmem:[#allocation7 + $0x30] sm:$0xf]
        %v497 = vld [vmem:[#allocation7 + $0x34] sm:$0xf]
        %v498 = vld [vmem:[#allocation7 + $0x38] sm:$0xf]
        %v499 = vld [vmem:[#allocation7 + $0x3c] sm:$0xf]
        %v500 = vld [vmem:[%s4] sm:$0x1]
        %v501 = vunpack.c.l.bf16 %v500
        %v502 = vperm.slane %v501, 0
        %v519 = vunpack.c.l.b16 %v484
        %v520 = vunpack.c.l.b16 %v485
        %v521 = vunpack.c.l.b16 %v486
        %v522 = vunpack.c.l.b16 %v487
        %v523 = vunpack.c.l.b16 %v488
        %v524 = vunpack.c.l.b16 %v489
        %v525 = vunpack.c.l.b16 %v490
        %v526 = vunpack.c.l.b16 %v491
        %v527 = vunpack.c.l.b16 %v492
        %v528 = vunpack.c.l.b16 %v493
        %v529 = vunpack.c.l.b16 %v494
        %v530 = vunpack.c.l.b16 %v495
        %v531 = vunpack.c.l.b16 %v496
        %v532 = vunpack.c.l.b16 %v497
        %v533 = vunpack.c.l.b16 %v498
        %v534 = vunpack.c.l.b16 %v499
        %v535 = vpack.c.b16 %v520, %v519
        %v536 = vpack.c.b16 %v522, %v521
        %v537 = vpack.c.b16 %v524, %v523
        %v538 = vpack.c.b16 %v526, %v525
        %v539 = vpack.c.b16 %v528, %v527
        %v540 = vpack.c.b16 %v530, %v529
        %v541 = vpack.c.b16 %v532, %v531
        %v542 = vpack.c.b16 %v534, %v533
        %551 = vmatpush.bf16.msra.mxu0 %v542
        %552 = vmatpush.bf16.msra.mxu0 %v541
        %553 = vmatpush.bf16.msra.mxu0 %v540
        %554 = vmatpush.bf16.msra.mxu0 %v539
        %555 = vmatpush.bf16.msra.mxu0 %v538
        %556 = vmatpush.bf16.msra.mxu0 %v537
        %557 = vmatpush.bf16.msra.mxu0 %v536
        %558 = vmatpush.bf16.msra.mxu0 %v535
        %559 = vmatmul.bf16.gmra.mxu0 %v476
        %v560 = vpop.f32.mrf.mxu0
        %v561 = vadd.f32 %v502, %v560
        %v562 = vpop.f32.mrf.mxu0
        %v563 = vadd.f32 %v502, %v562
        %564 = vmatmul.bf16.gmra.mxu0 %v477
        %v565 = vpop.f32.mrf.mxu0
        %v566 = vadd.f32 %v502, %v565
        %v567 = vpop.f32.mrf.mxu0
        %v568 = vadd.f32 %v502, %v567
        %569 = vmatmul.bf16.gmra.mxu0 %v478
        %v570 = vpop.f32.mrf.mxu0
        %v571 = vadd.f32 %v502, %v570
        %v572 = vpop.f32.mrf.mxu0
        %v573 = vadd.f32 %v502, %v572
        %574 = vmatmul.bf16.gmra.mxu0 %v479
        %v575 = vpop.f32.mrf.mxu0
        %v576 = vadd.f32 %v502, %v575
        %v577 = vpop.f32.mrf.mxu0
        %v578 = vadd.f32 %v502, %v577
        %579 = vmatmul.bf16.gmra.mxu0 %v480
        %v580 = vpop.f32.mrf.mxu0
        %v581 = vadd.f32 %v502, %v580
        %v582 = vpop.f32.mrf.mxu0
        %v583 = vadd.f32 %v502, %v582
        %584 = vmatmul.bf16.gmra.mxu0 %v481
        %v585 = vpop.f32.mrf.mxu0
        %v586 = vadd.f32 %v502, %v585
        %v587 = vpop.f32.mrf.mxu0
        %v588 = vadd.f32 %v502, %v587
        %589 = vmatmul.bf16.gmra.mxu0 %v482
        %v590 = vpop.f32.mrf.mxu0
        %v591 = vadd.f32 %v502, %v590
        %v592 = vpop.f32.mrf.mxu0
        %v593 = vadd.f32 %v502, %v592
        %594 = vmatmul.bf16.gmra.mxu0 %v483
        %v595 = vpop.f32.mrf.mxu0
        %v596 = vadd.f32 %v502, %v595
        %v597 = vpop.f32.mrf.mxu0
        %v598 = vadd.f32 %v502, %v597
        %599 = vdwg.mxu0
        %v600 = vpack.c.bf16 %v561, %v561
        %v601 = vpack.c.bf16 %v563, %v563
        %v602 = vpack.c.bf16 %v566, %v566
        %v603 = vpack.c.bf16 %v568, %v568
        %v604 = vpack.c.bf16 %v571, %v571
        %v605 = vpack.c.bf16 %v573, %v573
        %v606 = vpack.c.bf16 %v576, %v576
        %v607 = vpack.c.bf16 %v578, %v578
        %v608 = vpack.c.bf16 %v581, %v581
        %v609 = vpack.c.bf16 %v583, %v583
        %v610 = vpack.c.bf16 %v586, %v586
        %v611 = vpack.c.bf16 %v588, %v588
        %v612 = vpack.c.bf16 %v591, %v591
        %v613 = vpack.c.bf16 %v593, %v593
        %v614 = vpack.c.bf16 %v596, %v596
        %v615 = vpack.c.bf16 %v598, %v598
        %616 = vst [vmem:[%s277] sm:$0xf] %v600
        %617 = vst [vmem:[%s277 + $0x4] sm:$0xf] %v601
        %618 = vst [vmem:[%s277 + $0x8] sm:$0xf] %v602
        %619 = vst [vmem:[%s277 + $0xc] sm:$0xf] %v603
        %620 = vst [vmem:[%s277 + $0x10] sm:$0xf] %v604
        %621 = vst [vmem:[%s277 + $0x14] sm:$0xf] %v605
        %622 = vst [vmem:[%s277 + $0x18] sm:$0xf] %v606
        %623 = vst [vmem:[%s277 + $0x1c] sm:$0xf] %v607
        %624 = vst [vmem:[%s277 + $0x20] sm:$0xf] %v608
        %625 = vst [vmem:[%s277 + $0x24] sm:$0xf] %v609
        %626 = vst [vmem:[%s277 + $0x28] sm:$0xf] %v610
        %627 = vst [vmem:[%s277 + $0x2c] sm:$0xf] %v611
        %628 = vst [vmem:[%s277 + $0x30] sm:$0xf] %v612
        %629 = vst [vmem:[%s277 + $0x34] sm:$0xf] %v613
        %630 = vst [vmem:[%s277 + $0x38] sm:$0xf] %v614
        %631 = vst [vmem:[%s277 + $0x3c] sm:$0xf] %v615
        %s632 = sand.u32 %s141, 1
        %s633 = scalar_lea.sflag [#allocation4], %s632
        %s634 = sand.u32 %s141, 1
        %s635 = smul.addr %s634, 64
        %s636 = scalar_lea.vmem [#allocation8], %s635
        // Predicated region
        $region53: #{tpu_custom_call.1} parent=39 // pred_check
          %p637 = pneg %p151
        $region54: #{tpu_custom_call.1} parent=39 // pred_check_branch
          %639 = sbr.rel (%p637) target = $region56
        $region55: #{tpu_custom_call.1} parent=39 // pred_region
          %s640 = smul.u32 16, %s23
          %642 = vsyncadd %s633, 0
          %s643 = smul.addr %s640, 4
          %s644 = scalar_lea.hbm %s5, %s643
          %s645 = sshll.u32 %s636, 4
          %s646 = int_to_ptr.vmem [resolvable:$true] %s645
          %s647 = sshll.u32 %s644, 4
          %s648 = int_to_ptr.hbm [resolvable:$true] %s647
          %653 = dma.vmem_to_hbm [thread:$0]  %s646, 1024, %s648, %s633, 64, 64, 4
        $region56: #{tpu_custom_call.1} parent=39 // pred_fallthru
          _
      $region40: #{tpu_custom_call.1} parent=5 // pred_fallthru
        _
      %p654 = scmp.le.s32.totalorder 2, %s18
      // Predicated region
      $region57: #{tpu_custom_call.1} parent=5 // pred_check
        %p655 = pneg %p654
      $region58: #{tpu_custom_call.1} parent=5 // pred_check_branch
        %657 = sbr.rel (%p655) target = $region60
      $region59: #{tpu_custom_call.1} parent=5 // pred_region
        %s658 = ssub.s32 %s18, 2
        // Predicated region
        $region61: #{tpu_custom_call.1} parent=59 // pred_check
          %p659 = pneg %p157
        $region62: #{tpu_custom_call.1} parent=59 // pred_check_branch
          %661 = sbr.rel (%p659) target = $region64
        $region63: #{tpu_custom_call.1} parent=59 // pred_region
          %s662 = sand.u32 %s142, 1
          %s663 = scalar_lea.sflag [#allocation4], %s662
          %s664 = sand.u32 %s142, 1
          %s665 = smul.addr %s664, 64
          %s666 = scalar_lea.vmem [#allocation8], %s665
          %668 = dma.done %s663, 1024
        $region64: #{tpu_custom_call.1} parent=59 // pred_fallthru
          _
      $region60: #{tpu_custom_call.1} parent=5 // pred_fallthru
        _
    $region6: #{tpu_custom_call.1} parent=1 // loop_footer
      %s22 = sadd.s32 1, %s18
    $region7: #{tpu_custom_call.1} parent=1 // loop_footer_branch
      %17 = sbr.rel target = $region3
    $region8: #{tpu_custom_call.1} parent=1 // loop_exit
      _
    %669 = vsyncpa [#allocation3], 1
    %s670 = scalar_lea.sflag [#allocation3], 1
    %671 = vsyncpa %s670, 1
    %672 = vsyncpa [#allocation6], 1
    %673 = vsyncpa [#allocation4], 1
    %s674 = scalar_lea.sflag [#allocation4], 1
    %675 = vsyncpa %s674, 1

</llo_original>
